<compile_context>
chip_gen: v7x
topology: tpu7x:2x2x1
jax: 0.10.0
libtpu: 0.0.40
codegen_flags: <defaults>
</compile_context>

<pallas_src>
import numpy as np
import jax
import jax.numpy as jnp
from jax import lax
from jax.experimental import pallas as pl
from jax.experimental.pallas import tpu as pltpu

SMOOTH = 1e-5


def _make_dice_partial_kernel(C, HW, tn):
    """Kernel producing per-batch, per-class (intersection, union) partial sums."""
    needs_mask = (HW % tn) != 0

    def kernel(p_ref, t_ref, inter_out, union_out, inter_acc, union_acc):
        i = pl.program_id(1)  # tile index along the flattened H*W axis

        @pl.when(i == 0)
        def _init():
            inter_acc[...] = jnp.zeros_like(inter_acc)
            union_acc[...] = jnp.zeros_like(union_acc)

        p = p_ref[...].astype(jnp.float32)   # (C, tn)
        t = t_ref[...].astype(jnp.float32)   # (C, tn)

        if needs_mask:
            # Zero out lanes past the true H*W extent (only the last, partial tile
            # actually has invalid lanes; the compare is cheap VPU work).
            col = lax.broadcasted_iota(jnp.int32, (1, tn), 1) + i * tn
            valid = col < HW
            p = jnp.where(valid, p, 0.0)
            t = jnp.where(valid, t, 0.0)

        # Lane-dense accumulation: pure VPU adds, no per-step cross-lane reduce.
        inter_acc[...] += p * t
        union_acc[...] += p + t

        @pl.when(i == pl.num_programs(1) - 1)
        def _finalize():
            inter_out[...] = jnp.sum(inter_acc[...], axis=1, keepdims=True)
            union_out[...] = jnp.sum(union_acc[...], axis=1, keepdims=True)

    return kernel


def _pick_tile(C, HW, itemsize, budget_bytes=6 * 1024 * 1024, max_tn=32768):
    """Lane tile: multiple of 128, big enough to amortize per-step overhead,
    small enough that (2 inputs x 2 double-buffers) + 2 f32 accumulators fit the
    scoped-VMEM default on every TPU generation. If the whole H*W axis fits,
    use a single full-extent block (no mask, no padding)."""
    c_pad = -(-C // 8) * 8                          # sublane padding of VMEM tiles
    per_lane_bytes = c_pad * (4 * itemsize + 2 * 4)  # 2x2 input buffers + 2 f32 accs
    tn = (budget_bytes // per_lane_bytes) // 128 * 128
    tn = max(128, min(int(tn), max_tn))
    if tn >= HW:
        return HW          # one tile covering the full (possibly ragged) extent
    return tn


def custom_loss_dice(predict, target, weight, reduction="mean", tn=None):
    """dice_loss_efficient with class weights (Custom_Loss(loss_type='dice'))."""
    B, C, H, W = predict.shape
    HW = H * W

    # Free reshapes of contiguous NCHW -> (B, C, H*W); no extra HBM pass.
    p3 = predict.reshape(B, C, HW)
    t3 = target.reshape(B, C, HW)

    itemsize = max(jnp.dtype(p3.dtype).itemsize, jnp.dtype(t3.dtype).itemsize)
    if tn is None:
        tn = _pick_tile(C, HW, itemsize)
    num_tiles = -(-HW // tn)

    kernel = _make_dice_partial_kernel(C, HW, tn)

    inter_p, union_p = pl.pallas_call(
        kernel,
        out_shape=(
            jax.ShapeDtypeStruct((B, C, 1), jnp.float32),
            jax.ShapeDtypeStruct((B, C, 1), jnp.float32),
        ),
        grid_spec=pltpu.PrefetchScalarGridSpec(
            num_scalar_prefetch=0,
            grid=(B, num_tiles),
            in_specs=[
                pl.BlockSpec((None, C, tn), lambda b, i: (b, 0, i)),
                pl.BlockSpec((None, C, tn), lambda b, i: (b, 0, i)),
            ],
            out_specs=[
                pl.BlockSpec((None, C, 1), lambda b, i: (b, 0, 0)),
                pl.BlockSpec((None, C, 1), lambda b, i: (b, 0, 0)),
            ],
            scratch_shapes=[
                pltpu.VMEM((C, tn), jnp.float32),
                pltpu.VMEM((C, tn), jnp.float32),
            ],
        ),
        compiler_params=pltpu.CompilerParams(
            dimension_semantics=("parallel", "arbitrary")),
    )(p3, t3)

    # Tiny O(B*C) epilogue: combine per-batch partials and apply class weights.
    inter_c = jnp.sum(inter_p[..., 0], axis=0)   # (C,)
    union_c = jnp.sum(union_p[..., 0], axis=0)   # (C,)
    w = weight.astype(jnp.float32).reshape(C)
    per_class = w * (1.0 - (2.0 * inter_c + SMOOTH) / (union_c + SMOOTH))
    loss = jnp.sum(per_class)
    if reduction == "mean":
        loss = loss / C
    return loss


def _ref_dice_loss(predict, target, weight, reduction="mean"):
    """Pure-JAX reference mirroring dice_loss_efficient semantics."""
    C = predict.shape[1]
    total = 0.0
    for c in range(C):
        iflat = predict[:, c].astype(jnp.float32).reshape(-1)
        tflat = target[:, c].astype(jnp.float32).reshape(-1)
        inter = jnp.sum(iflat * tflat)
        union = jnp.sum(iflat) + jnp.sum(tflat)
        total = total + weight[c] * (1.0 - (2.0 * inter + SMOOTH) / (union + SMOOTH))
    if reduction == "mean":
        return total / C
    return total


# TODO(synk): other loss_type branches ('bce_dice', 'focal', 'bce') are not exercised
# by the default Custom_Loss() configuration and are not implemented here.

if __name__ == "__main__":
    key = jax.random.PRNGKey(0)
    k1, k2, k3, k4, k5, k6 = jax.random.split(key, 6)

    # Case 1: default small shape (B=2, C=4, 16x16); H*W is a multiple of 128.
    B, C, H, W = 2, 4, 16, 16
    predict = jax.random.uniform(k1, (B, C, H, W), dtype=jnp.float32,
                                 minval=0.01, maxval=0.99)
    target = jax.random.bernoulli(k2, 0.5, (B, C, H, W)).astype(jnp.float32)
    weight = jnp.array([0.4, 0.3, 0.2, 0.1], dtype=jnp.float32)

    loss = jax.block_until_ready(custom_loss_dice(predict, target, weight))
    ref = jax.block_until_ready(_ref_dice_loss(predict, target, weight))
    assert np.allclose(np.asarray(loss), np.asarray(ref), rtol=1e-5, atol=1e-6), (loss, ref)

    # Case 2: ragged H*W handled by a single full-extent block; odd B and C.
    B2, C2, H2, W2 = 3, 5, 13, 13
    predict2 = jax.random.uniform(k3, (B2, C2, H2, W2), dtype=jnp.float32,
                                  minval=0.01, maxval=0.99)
    target2 = jax.random.bernoulli(k4, 0.5, (B2, C2, H2, W2)).astype(jnp.float32)
    weight2 = jnp.linspace(0.1, 1.0, C2, dtype=jnp.float32)

    loss2 = jax.block_until_ready(custom_loss_dice(predict2, target2, weight2))
    ref2 = jax.block_until_ready(_ref_dice_loss(predict2, target2, weight2))
    assert np.allclose(np.asarray(loss2), np.asarray(ref2), rtol=1e-5, atol=1e-6), (loss2, ref2)

    # Case 3: multi-tile path with a ragged last tile (exercises the in-kernel mask)
    # by forcing a small tile size.
    B3, C3, H3, W3 = 2, 3, 20, 20   # HW = 400, tn = 128 -> 4 tiles, last partial
    predict3 = jax.random.uniform(k5, (B3, C3, H3, W3), dtype=jnp.float32,
                                  minval=0.01, maxval=0.99)
    target3 = jax.random.bernoulli(k6, 0.5, (B3, C3, H3, W3)).astype(jnp.float32)
    weight3 = jnp.array([0.5, 0.3, 0.2], dtype=jnp.float32)

    loss3 = jax.block_until_ready(custom_loss_dice(predict3, target3, weight3, tn=128))
    ref3 = jax.block_until_ready(_ref_dice_loss(predict3, target3, weight3))
    assert np.allclose(np.asarray(loss3), np.asarray(ref3), rtol=1e-5, atol=1e-6), (loss3, ref3)

    print("KERNEL_OK")
</pallas_src>

<mosaic_0001>
module attributes {stable_mosaic.version = 11 : i64} {
  func.func @kernel(%arg0: i32, %arg1: i32, %arg2: memref<1x4x256xf32, #tpu.memory_space<vmem>>, %arg3: memref<1x4x256xf32, #tpu.memory_space<vmem>>, %arg4: memref<1x4x1xf32, #tpu.memory_space<vmem>>, %arg5: memref<1x4x1xf32, #tpu.memory_space<vmem>>, %arg6: memref<4x256xf32, #tpu.memory_space<vmem>>, %arg7: memref<4x256xf32, #tpu.memory_space<vmem>>) attributes {dimension_semantics = [#tpu.dimension_semantics<parallel>, #tpu.dimension_semantics<arbitrary>], iteration_bounds = array<i64: 2, 1>, scalar_prefetch = 0 : i64, scratch_operands = 2 : i64, tpu.core_type = #tpu.core_type<tc>, window_params = [{transform_indices = @transform_0, window_bounds = array<i64: 1, 4, 256>}, {transform_indices = @transform_1, window_bounds = array<i64: 1, 4, 256>}, {transform_indices = @transform_2, window_bounds = array<i64: 1, 4, 1>}, {transform_indices = @transform_3, window_bounds = array<i64: 1, 4, 1>}]} {
    %c0_i32 = arith.constant 0 : i32
    %0 = arith.cmpi eq, %arg1, %c0_i32 : i32
    %1 = arith.extui %0 : i1 to i32
    %c0_i32_0 = arith.constant 0 : i32
    %2 = arith.cmpi ne, %1, %c0_i32_0 : i32
    scf.if %2 {
      %cst = arith.constant 0.000000e+00 : f32
      %18 = vector.broadcast %cst : f32 to vector<4x256xf32>
      %c0_16 = arith.constant 0 : index
      %c0_17 = arith.constant 0 : index
      %19 = vector.load %arg6[%c0_16, %c0_17] : memref<4x256xf32, #tpu.memory_space<vmem>>, vector<4x256xf32>
      tpu.vector_store %arg6[%c0_16, %c0_17], %18 {strides = array<i32>} : memref<4x256xf32, #tpu.memory_space<vmem>>, vector<4x256xf32>,
      %cst_18 = arith.constant 0.000000e+00 : f32
      %20 = vector.broadcast %cst_18 : f32 to vector<4x256xf32>
      %c0_19 = arith.constant 0 : index
      %c0_20 = arith.constant 0 : index
      %21 = vector.load %arg7[%c0_19, %c0_20] : memref<4x256xf32, #tpu.memory_space<vmem>>, vector<4x256xf32>
      tpu.vector_store %arg7[%c0_19, %c0_20], %20 {strides = array<i32>} : memref<4x256xf32, #tpu.memory_space<vmem>>, vector<4x256xf32>,
    } else {
    }
    %c0 = arith.constant 0 : index
    %c0_1 = arith.constant 0 : index
    %c0_2 = arith.constant 0 : index
    %3 = vector.load %arg2[%c0, %c0_1, %c0_2] : memref<1x4x256xf32, #tpu.memory_space<vmem>>, vector<1x4x256xf32>
    %4 = vector.shape_cast %3 : vector<1x4x256xf32> to vector<4x256xf32>
    %c0_3 = arith.constant 0 : index
    %c0_4 = arith.constant 0 : index
    %c0_5 = arith.constant 0 : index
    %5 = vector.load %arg3[%c0_3, %c0_4, %c0_5] : memref<1x4x256xf32, #tpu.memory_space<vmem>>, vector<1x4x256xf32>
    %6 = vector.shape_cast %5 : vector<1x4x256xf32> to vector<4x256xf32>
    %c0_6 = arith.constant 0 : index
    %c0_7 = arith.constant 0 : index
    %7 = vector.load %arg6[%c0_6, %c0_7] : memref<4x256xf32, #tpu.memory_space<vmem>>, vector<4x256xf32>
    %8 = arith.mulf %4, %6 : vector<4x256xf32>
    %9 = arith.addf %7, %8 : vector<4x256xf32>
    %c0_8 = arith.constant 0 : index
    %c0_9 = arith.constant 0 : index
    %10 = vector.load %arg6[%c0_8, %c0_9] : memref<4x256xf32, #tpu.memory_space<vmem>>, vector<4x256xf32>
    tpu.vector_store %arg6[%c0_8, %c0_9], %9 {strides = array<i32>} : memref<4x256xf32, #tpu.memory_space<vmem>>, vector<4x256xf32>,
    %c0_10 = arith.constant 0 : index
    %c0_11 = arith.constant 0 : index
    %11 = vector.load %arg7[%c0_10, %c0_11] : memref<4x256xf32, #tpu.memory_space<vmem>>, vector<4x256xf32>
    %12 = arith.addf %4, %6 : vector<4x256xf32>
    %13 = arith.addf %11, %12 : vector<4x256xf32>
    %c0_12 = arith.constant 0 : index
    %c0_13 = arith.constant 0 : index
    %14 = vector.load %arg7[%c0_12, %c0_13] : memref<4x256xf32, #tpu.memory_space<vmem>>, vector<4x256xf32>
    tpu.vector_store %arg7[%c0_12, %c0_13], %13 {strides = array<i32>} : memref<4x256xf32, #tpu.memory_space<vmem>>, vector<4x256xf32>,
    %c0_i32_14 = arith.constant 0 : i32
    %15 = arith.cmpi eq, %arg1, %c0_i32_14 : i32
    %16 = arith.extui %15 : i1 to i32
    %c0_i32_15 = arith.constant 0 : i32
    %17 = arith.cmpi ne, %16, %c0_i32_15 : i32
    scf.if %17 {
      %c0_16 = arith.constant 0 : index
      %c0_17 = arith.constant 0 : index
      %18 = vector.load %arg6[%c0_16, %c0_17] : memref<4x256xf32, #tpu.memory_space<vmem>>, vector<4x256xf32>
      %cst = arith.constant dense<0.000000e+00> : vector<4xf32>
      %19 = vector.multi_reduction <add>, %18, %cst [1] : vector<4x256xf32> to vector<4xf32>
      %20 = vector.shape_cast %19 : vector<4xf32> to vector<4x1xf32>
      %c0_18 = arith.constant 0 : index
      %c0_19 = arith.constant 0 : index
      %c0_20 = arith.constant 0 : index
      %21 = vector.load %arg4[%c0_18, %c0_19, %c0_20] : memref<1x4x1xf32, #tpu.memory_space<vmem>>, vector<1x4x1xf32>
      %22 = vector.shape_cast %21 : vector<1x4x1xf32> to vector<4x1xf32>
      %23 = vector.shape_cast %20 : vector<4x1xf32> to vector<1x4x1xf32>
      tpu.vector_store %arg4[%c0_18, %c0_19, %c0_20], %23 {strides = array<i32>} : memref<1x4x1xf32, #tpu.memory_space<vmem>>, vector<1x4x1xf32>,
      %c0_21 = arith.constant 0 : index
      %c0_22 = arith.constant 0 : index
      %24 = vector.load %arg7[%c0_21, %c0_22] : memref<4x256xf32, #tpu.memory_space<vmem>>, vector<4x256xf32>
      %cst_23 = arith.constant dense<0.000000e+00> : vector<4xf32>
      %25 = vector.multi_reduction <add>, %24, %cst_23 [1] : vector<4x256xf32> to vector<4xf32>
      %26 = vector.shape_cast %25 : vector<4xf32> to vector<4x1xf32>
      %c0_24 = arith.constant 0 : index
      %c0_25 = arith.constant 0 : index
      %c0_26 = arith.constant 0 : index
      %27 = vector.load %arg5[%c0_24, %c0_25, %c0_26] : memref<1x4x1xf32, #tpu.memory_space<vmem>>, vector<1x4x1xf32>
      %28 = vector.shape_cast %27 : vector<1x4x1xf32> to vector<4x1xf32>
      %29 = vector.shape_cast %26 : vector<4x1xf32> to vector<1x4x1xf32>
      tpu.vector_store %arg5[%c0_24, %c0_25, %c0_26], %29 {strides = array<i32>} : memref<1x4x1xf32, #tpu.memory_space<vmem>>, vector<1x4x1xf32>,
    } else {
    }
    return
  }
  func.func @transform_0(%arg0: i32, %arg1: i32) -> (i32, i32, i32) {
    %c0_i32 = arith.constant 0 : i32
    %c0_i32_0 = arith.constant 0 : i32
    return %arg0, %c0_i32, %arg1 : i32, i32, i32
  }
  func.func @transform_1(%arg0: i32, %arg1: i32) -> (i32, i32, i32) {
    %c0_i32 = arith.constant 0 : i32
    %c0_i32_0 = arith.constant 0 : i32
    return %arg0, %c0_i32, %arg1 : i32, i32, i32
  }
  func.func @transform_2(%arg0: i32, %arg1: i32) -> (i32, i32, i32) {
    %c0_i32 = arith.constant 0 : i32
    %c0_i32_0 = arith.constant 0 : i32
    %c0_i32_1 = arith.constant 0 : i32
    return %arg0, %c0_i32, %c0_i32_0 : i32, i32, i32
  }
  func.func @transform_3(%arg0: i32, %arg1: i32) -> (i32, i32, i32) {
    %c0_i32 = arith.constant 0 : i32
    %c0_i32_0 = arith.constant 0 : i32
    %c0_i32_1 = arith.constant 0 : i32
    return %arg0, %c0_i32, %c0_i32_0 : i32, i32, i32
  }
}

</mosaic_0001>

<llo_original>
// kernel: tpu_custom_call.1
$region0: #{tpu_custom_call.1}
  #allocation0 [shape = 'u32[]', space=smem, size = 0x4, offset = 0x4, fixed_abs, tag = 'smem constant byte address 0x4 - core index']
  #allocation1 [shape = 'u32[144,128]{1,0:T(1,128)}', space=vmem, size = 0x12000, scoped, tag = 'internal scratch']
  #allocation2 [shape = 'f32[4,256]{1,0:T(4,128)}', space=vmem, size = 0x1000, scoped, tag = 'scratch operand']
  #allocation3 [shape = 'f32[4,256]{1,0:T(4,128)}', space=vmem, size = 0x1000, scoped, tag = 'scratch operand']
  %s0 = inlined_call_operand.hbm [shape: f32[2,4,256], index: 0, kind: input, shape index: {}]
  %s1 = inlined_call_operand.hbm [shape: f32[2,4,256], index: 1, kind: input, shape index: {}]
  %s2 = inlined_call_operand.vmem [shape: f32[2,4,1], index: 2, kind: output, shape index: {0}]
  %s3 = inlined_call_operand.vmem [shape: f32[2,4,1], index: 3, kind: output, shape index: {1}]
  %4 = xla_tuple %s2, %s3
  %s5 = sld [smem:[#allocation0]]
  $region65: #{tpu_custom_call.1} parent=0
    _
  %s7 = ssub.s32 1, %s5
  %s8 = scalar_select 0, %s7, %s5
  $region1: #{tpu_custom_call.1} parent=0
    #allocation4 [shape = 'u8[8192]{0}', space=vmem, size = 0x2000, scoped, tag = 'input window, operand 0']
    #allocation5 [shape = 's32[2]{0}', space=sflag, size = 0x8, scoped, tag = 'scoped memory for tpu_custom_call.1']
    #allocation6 [shape = 'u8[8192]{0}', space=vmem, size = 0x2000, scoped, tag = 'input window, operand 1']
    #allocation7 [shape = 's32[2]{0}', space=sflag, size = 0x8, scoped, tag = 'scoped memory for tpu_custom_call.1']
    %9 = vsyncpa [#allocation5], 0
    %s10 = scalar_lea.sflag [#allocation5], 1
    %11 = vsyncpa %s10, 0
    %12 = vsyncpa [#allocation7], 0
    %s13 = scalar_lea.sflag [#allocation7], 1
    %14 = vsyncpa %s13, 0
    loop: start=0, step=1, limit=4
    $region2: #{tpu_custom_call.1} parent=1 // loop_pre_header
      _
    $region3: #{tpu_custom_call.1} parent=1 // loop_header
      %s16 = sphi 0, %s20
      %p17 = scmp.ge.s32.totalorder %s16, 4
      %s23 = sphi 0, %s35
      %s24 = sphi 0, %s31
      %s25 = sphi 0, %s23
      %s26 = sphi 0, %s24
      %s27 = sphi 0, %s25
      %s28 = sphi 0, %s26
      %s40 = sphi 0, %s42
      %s43 = sphi 0, %s40
      %s44 = sphi 0, %s43
      %s60 = sphi 0, %s44
      %s68 = sphi 0, %s70
      %s71 = sphi 0, %s68
      %s72 = sphi 0, %s71
      %s88 = sphi 0, %s72
      %s94 = sphi 0, %s96
      %s97 = sphi 0, %s94
      %s98 = sphi 0, %s97
      %s114 = sphi 0, %s98
      %s120 = sphi 0, %s122
      %s123 = sphi 0, %s120
      %s124 = sphi 0, %s123
      %s140 = sphi 0, %s124
    $region4: #{tpu_custom_call.1} parent=1 // loop_header_branch
      %19 = sbr.rel (%p17) target = $region8
    $region5: #{tpu_custom_call.1} parent=1 // loop_body
      %s21 = ssub.s32 %s16, 1
      %s22 = ssub.s32 %s16, 2
      %s29 = sadd.s32 1, %s24
      %p30 = scmp.ge.s32.totalorder %s29, 1
      %s31 = scalar_select %p30, 0, %s29
      %s32 = sadd.s32 1, %s23
      %s33 = scalar_select %p30, %s32, %s23
      %p34 = scmp.ge.s32.totalorder %s33, 2
      %s35 = scalar_select %p34, 0, %s33
      %s36 = ssub.s32 %s23, %s35
      %s37 = ssub.s32 %s24, %s31
      %s38 = sor.u32 %s36, %s37
      %p39 = scmp.eq.s32.totalorder %s38, 0
      %s41 = sadd.s32 %s40, 1
      %s42 = scalar_select %p39, %s40, %s41
      %p45 = pneg %p39
      %p46 = scmp.eq.s32.totalorder %s16, 1
      %p47 = por %p45, %p46
      %p48 = scmp.ne.s32.totalorder %s40, %s43
      %p49 = scmp.eq.s32.totalorder %s16, 0
      %p50 = por %p48, %p49
      %p51 = scmp.ne.s32.totalorder %s40, %s43
      %p52 = scmp.eq.s32.totalorder %s21, 1
      %p53 = por %p51, %p52
      %p54 = scmp.ne.s32.totalorder %s43, %s44
      %p55 = scmp.eq.s32.totalorder %s21, 0
      %p56 = por %p54, %p55
      %p57 = scmp.ne.s32.totalorder %s43, %s44
      %p58 = scmp.eq.s32.totalorder %s22, 1
      %p59 = por %p57, %p58
      %p61 = scmp.ne.s32.totalorder %s44, %s60
      %p62 = scmp.eq.s32.totalorder %s22, 0
      %p63 = por %p61, %p62
      %s64 = ssub.s32 %s23, %s35
      %s65 = ssub.s32 %s24, %s31
      %s66 = sor.u32 %s64, %s65
      %p67 = scmp.eq.s32.totalorder %s66, 0
      %s69 = sadd.s32 %s68, 1
      %s70 = scalar_select %p67, %s68, %s69
      %p73 = pneg %p67
      %p74 = scmp.eq.s32.totalorder %s16, 1
      %p75 = por %p73, %p74
      %p76 = scmp.ne.s32.totalorder %s68, %s71
      %p77 = scmp.eq.s32.totalorder %s16, 0
      %p78 = por %p76, %p77
      %p79 = scmp.ne.s32.totalorder %s68, %s71
      %p80 = scmp.eq.s32.totalorder %s21, 1
      %p81 = por %p79, %p80
      %p82 = scmp.ne.s32.totalorder %s71, %s72
      %p83 = scmp.eq.s32.totalorder %s21, 0
      %p84 = por %p82, %p83
      %p85 = scmp.ne.s32.totalorder %s71, %s72
      %p86 = scmp.eq.s32.totalorder %s22, 1
      %p87 = por %p85, %p86
      %p89 = scmp.ne.s32.totalorder %s72, %s88
      %p90 = scmp.eq.s32.totalorder %s22, 0
      %p91 = por %p89, %p90
      %s92 = ssub.s32 %s23, %s35
      %p93 = scmp.eq.s32.totalorder %s92, 0
      %s95 = sadd.s32 %s94, 1
      %s96 = scalar_select %p93, %s94, %s95
      %p99 = pneg %p93
      %p100 = scmp.eq.s32.totalorder %s16, 1
      %p101 = por %p99, %p100
      %p102 = scmp.ne.s32.totalorder %s94, %s97
      %p103 = scmp.eq.s32.totalorder %s16, 0
      %p104 = por %p102, %p103
      %p105 = scmp.ne.s32.totalorder %s94, %s97
      %p106 = scmp.eq.s32.totalorder %s21, 1
      %p107 = por %p105, %p106
      %p108 = scmp.ne.s32.totalorder %s97, %s98
      %p109 = scmp.eq.s32.totalorder %s21, 0
      %p110 = por %p108, %p109
      %p111 = scmp.ne.s32.totalorder %s97, %s98
      %p112 = scmp.eq.s32.totalorder %s22, 1
      %p113 = por %p111, %p112
      %p115 = scmp.ne.s32.totalorder %s98, %s114
      %p116 = scmp.eq.s32.totalorder %s22, 0
      %p117 = por %p115, %p116
      %s118 = ssub.s32 %s23, %s35
      %p119 = scmp.eq.s32.totalorder %s118, 0
      %s121 = sadd.s32 %s120, 1
      %s122 = scalar_select %p119, %s120, %s121
      %p125 = pneg %p119
      %p126 = scmp.eq.s32.totalorder %s16, 1
      %p127 = por %p125, %p126
      %p128 = scmp.ne.s32.totalorder %s120, %s123
      %p129 = scmp.eq.s32.totalorder %s16, 0
      %p130 = por %p128, %p129
      %p131 = scmp.ne.s32.totalorder %s120, %s123
      %p132 = scmp.eq.s32.totalorder %s21, 1
      %p133 = por %p131, %p132
      %p134 = scmp.ne.s32.totalorder %s123, %s124
      %p135 = scmp.eq.s32.totalorder %s21, 0
      %p136 = por %p134, %p135
      %p137 = scmp.ne.s32.totalorder %s123, %s124
      %p138 = scmp.eq.s32.totalorder %s22, 1
      %p139 = por %p137, %p138
      %p141 = scmp.ne.s32.totalorder %s124, %s140
      %p142 = scmp.eq.s32.totalorder %s22, 0
      %p143 = por %p141, %p142
      %p144 = scmp.le.s32.totalorder 1, %s16
      %p145 = scmp.lt.s32.totalorder %s16, 3
      %p146 = pnand %p144, %p145
      %p147 = pneg %p146
      // Predicated region
      $region9: #{tpu_custom_call.1} parent=5 // pred_check
        _
      $region10: #{tpu_custom_call.1} parent=5 // pred_check_branch
        %149 = sbr.rel (%p146) target = $region12
      $region11: #{tpu_custom_call.1} parent=5 // pred_region
        %s150 = ssub.s32 %s16, 1
      $region12: #{tpu_custom_call.1} parent=5 // pred_fallthru
        _
      %p151 = scmp.lt.s32.totalorder %s16, 2
      // Predicated region
      $region13: #{tpu_custom_call.1} parent=5 // pred_check
        %p152 = pneg %p151
      $region14: #{tpu_custom_call.1} parent=5 // pred_check_branch
        %154 = sbr.rel (%p152) target = $region16
      $region15: #{tpu_custom_call.1} parent=5 // pred_region
        // Predicated region
        $region17: #{tpu_custom_call.1} parent=15 // pred_check
          %p155 = pneg %p50
        $region18: #{tpu_custom_call.1} parent=15 // pred_check_branch
          %157 = sbr.rel (%p155) target = $region20
        $region19: #{tpu_custom_call.1} parent=15 // pred_region
          %s158 = sand.u32 %s40, 1
          %s159 = scalar_lea.sflag [#allocation5], %s158
          %s160 = sand.u32 %s40, 1
          %s161 = smul.addr %s160, 8
          %s162 = scalar_lea.vmem [#allocation4], %s161
          %s163 = smul.u32 2, %s24
          %s165 = ssub.s32 128, 128
          %166 = vsyncadd %s159, %s165
          %s167 = smul.addr %s23, 2
          %s168 = sadd.s32 %s163, %s167
          %s169 = smul.addr %s168, 64
          %s170 = scalar_lea.hbm %s0, %s169
          %s172 = sshll.u32 %s162, 4
          %s173 = int_to_ptr.vmem [resolvable:$true] %s172
          %175 = dma.hbm_to_vmem [thread:$0]  %s170, 128, %s173, %s159
        $region20: #{tpu_custom_call.1} parent=15 // pred_fallthru
          _
        // Predicated region
        $region21: #{tpu_custom_call.1} parent=15 // pred_check
          %p176 = pneg %p78
        $region22: #{tpu_custom_call.1} parent=15 // pred_check_branch
          %178 = sbr.rel (%p176) target = $region24
        $region23: #{tpu_custom_call.1} parent=15 // pred_region
          %s179 = sand.u32 %s68, 1
          %s180 = scalar_lea.sflag [#allocation7], %s179
          %s181 = sand.u32 %s68, 1
          %s182 = smul.addr %s181, 8
          %s183 = scalar_lea.vmem [#allocation6], %s182
          %s184 = smul.u32 2, %s24
          %s186 = ssub.s32 128, 128
          %187 = vsyncadd %s180, %s186
          %s188 = smul.addr %s23, 2
          %s189 = sadd.s32 %s184, %s188
          %s190 = smul.addr %s189, 64
          %s191 = scalar_lea.hbm %s1, %s190
          %s193 = sshll.u32 %s183, 4
          %s194 = int_to_ptr.vmem [resolvable:$true] %s193
          %196 = dma.hbm_to_vmem [thread:$0]  %s191, 128, %s194, %s180
        $region24: #{tpu_custom_call.1} parent=15 // pred_fallthru
          _
      $region16: #{tpu_custom_call.1} parent=5 // pred_fallthru
        _
      %p197 = scmp.le.s32.totalorder 1, %s16
      %p198 = scmp.lt.s32.totalorder %s16, 3
      %p199 = pnand %p197, %p198
      %p200 = pneg %p199
      // Predicated region
      $region25: #{tpu_custom_call.1} parent=5 // pred_check
        _
      $region26: #{tpu_custom_call.1} parent=5 // pred_check_branch
        %202 = sbr.rel (%p199) target = $region28
      $region27: #{tpu_custom_call.1} parent=5 // pred_region
        %s203 = ssub.s32 %s16, 1
        %s204 = sand.u32 %s43, 1
        %s205 = scalar_lea.sflag [#allocation5], %s204
        %s206 = sand.u32 %s43, 1
        %s207 = smul.addr %s206, 8
        %s208 = scalar_lea.vmem [#allocation4], %s207
        // Predicated region
        $region29: #{tpu_custom_call.1} parent=27 // pred_check
          %p209 = pneg %p56
        $region30: #{tpu_custom_call.1} parent=27 // pred_check_branch
          %211 = sbr.rel (%p209) target = $region32
        $region31: #{tpu_custom_call.1} parent=27 // pred_region
          %212 = dma.done %s205, 128
        $region32: #{tpu_custom_call.1} parent=27 // pred_fallthru
          _
        %s213 = sand.u32 %s71, 1
        %s214 = scalar_lea.sflag [#allocation7], %s213
        %s215 = sand.u32 %s71, 1
        %s216 = smul.addr %s215, 8
        %s217 = scalar_lea.vmem [#allocation6], %s216
        // Predicated region
        $region33: #{tpu_custom_call.1} parent=27 // pred_check
          %p218 = pneg %p84
        $region34: #{tpu_custom_call.1} parent=27 // pred_check_branch
          %220 = sbr.rel (%p218) target = $region36
        $region35: #{tpu_custom_call.1} parent=27 // pred_region
          %221 = dma.done %s214, 128
        $region36: #{tpu_custom_call.1} parent=27 // pred_fallthru
          _
        %s222 = sand.u32 %s43, 1
        %s223 = scalar_lea.sflag [#allocation5], %s222
        %s224 = sand.u32 %s43, 1
        %s225 = smul.addr %s224, 8
        %s226 = scalar_lea.vmem [#allocation4], %s225
        %p227 = pneg %p56
        %p228 = pneg %p53
        %s229 = sand.u32 %s71, 1
        %s230 = scalar_lea.sflag [#allocation7], %s229
        %s231 = sand.u32 %s71, 1
        %s232 = smul.addr %s231, 8
        %s233 = scalar_lea.vmem [#allocation6], %s232
        %p234 = pneg %p84
        %p235 = pneg %p81
        %p236 = pneg %p110
        %p237 = pneg %p107
        %p238 = scmp.lt.s32.totalorder %s25, 1
        %s239 = scalar_select %p238, %s25, 1
        %s240 = smul.addr %s239, 4
        %s241 = scalar_lea.vmem %s2, %s240
        %p242 = pneg %p136
        %p243 = pneg %p133
        %p244 = scmp.lt.s32.totalorder %s25, 1
        %s245 = scalar_select %p244, %s25, 1
        %s246 = smul.addr %s245, 4
        %s247 = scalar_lea.vmem %s3, %s246
        %s248 = smul.u32 2, %s26
        %s249 = smul.u32 2, %s26
        %p250 = scmp.lt.s32.totalorder %s25, 1
        %s251 = scalar_select %p250, %s25, 1
        %s252 = smul.addr %s251, 4
        %s253 = scalar_lea.vmem %s2, %s252
        %p254 = scmp.lt.s32.totalorder %s25, 1
        %s255 = scalar_select %p254, %s25, 1
        %s256 = smul.addr %s255, 4
        %s257 = scalar_lea.vmem %s3, %s256
        %p258 = scmp.eq.s32.totalorder %s26, 0
        // Predicated region
        $region37: #{tpu_custom_call.1} parent=27 // pred_check
          %p259 = pneg %p258
        $region38: #{tpu_custom_call.1} parent=27 // pred_check_branch
          %261 = sbr.rel (%p259) target = $region40
        $region39: #{tpu_custom_call.1} parent=27 // pred_region
          %262 = vst [vmem:[#allocation2] sm:$0xff] 0.0
          %263 = vst [vmem:[#allocation3] sm:$0xff] 0.0
        $region40: #{tpu_custom_call.1} parent=27 // pred_fallthru
          _
        %v264 = vld [vmem:[%s208] sm:$0xff]
        %v265 = vld [vmem:[%s217] sm:$0xff]
        %v266 = vld [vmem:[#allocation2] sm:$0xff]
        %v267 = vmul.f32 %v264, %v265
        %v268 = vadd.f32 %v266, %v267
        %269 = vst [vmem:[#allocation2] sm:$0xff] %v268
        %v270 = vld [vmem:[#allocation3] sm:$0xff]
        %v271 = vadd.f32 %v264, %v265
        %v272 = vadd.f32 %v270, %v271
        %273 = vst [vmem:[#allocation3] sm:$0xff] %v272
        // Predicated region
        $region41: #{tpu_custom_call.1} parent=27 // pred_check
          %p274 = pneg %p258
        $region42: #{tpu_custom_call.1} parent=27 // pred_check_branch
          %276 = sbr.rel (%p274) target = $region44
        $region43: #{tpu_custom_call.1} parent=27 // pred_region
          %v277 = vld [vmem:[#allocation2] sm:$0xff]
          %v279 = vcombine.high %v277, %v277
          %vm281 = vcmask 1043456
          %v282 = vsel %vm281, %v277, 0.0
          %v283 = vsel %vm281, %v279, 0.0
          %v284 = vadd.f32 %v282, %v283
          %285 = vadd.xlane.f32.xlu0 %v284
          %v286 = vpop.xlane.xlu0 %285
          %vm287 = vcmask 3072
          %288 = vst.msk [vmem:[%s253] sm:$0xf] %vm287, %v286
          %v289 = vld [vmem:[#allocation3] sm:$0xff]
          %v291 = vcombine.high %v289, %v289
          %v293 = vsel %vm281, %v289, 0.0
          %v294 = vsel %vm281, %v291, 0.0
          %v295 = vadd.f32 %v293, %v294
          %296 = vadd.xlane.f32.xlu0 %v295
          %v297 = vpop.xlane.xlu0 %296
          %298 = vst.msk [vmem:[%s257] sm:$0xf] %vm287, %v297
        $region44: #{tpu_custom_call.1} parent=27 // pred_fallthru
          _
        %p299 = scmp.lt.s32.totalorder %s25, 1
        %s300 = scalar_select %p299, %s25, 1
        %s301 = smul.addr %s300, 4
        %s302 = scalar_lea.vmem %s2, %s301
        %p303 = scmp.lt.s32.totalorder %s25, 1
        %s304 = scalar_select %p303, %s25, 1
        %s305 = smul.addr %s304, 4
        %s306 = scalar_lea.vmem %s3, %s305
        // Predicated region
        $region45: #{tpu_custom_call.1} parent=27 // pred_check
          %p307 = pneg %p107
        $region46: #{tpu_custom_call.1} parent=27 // pred_check_branch
          %309 = sbr.rel (%p307) target = $region48
        $region47: #{tpu_custom_call.1} parent=27 // pred_region
          _
        $region48: #{tpu_custom_call.1} parent=27 // pred_fallthru
          _
        // Predicated region
        $region49: #{tpu_custom_call.1} parent=27 // pred_check
          %p310 = pneg %p133
        $region50: #{tpu_custom_call.1} parent=27 // pred_check_branch
          %312 = sbr.rel (%p310) target = $region52
        $region51: #{tpu_custom_call.1} parent=27 // pred_region
          _
        $region52: #{tpu_custom_call.1} parent=27 // pred_fallthru
          _
      $region28: #{tpu_custom_call.1} parent=5 // pred_fallthru
        _
      %p313 = scmp.le.s32.totalorder 2, %s16
      // Predicated region
      $region53: #{tpu_custom_call.1} parent=5 // pred_check
        %p314 = pneg %p313
      $region54: #{tpu_custom_call.1} parent=5 // pred_check_branch
        %316 = sbr.rel (%p314) target = $region56
      $region55: #{tpu_custom_call.1} parent=5 // pred_region
        %s317 = ssub.s32 %s16, 2
        // Predicated region
        $region57: #{tpu_custom_call.1} parent=55 // pred_check
          %p318 = pneg %p113
        $region58: #{tpu_custom_call.1} parent=55 // pred_check_branch
          %320 = sbr.rel (%p318) target = $region60
        $region59: #{tpu_custom_call.1} parent=55 // pred_region
          %p321 = scmp.lt.s32.totalorder %s27, 1
          %s322 = scalar_select %p321, %s27, 1
          %s323 = smul.addr %s322, 4
          %s324 = scalar_lea.vmem %s2, %s323
        $region60: #{tpu_custom_call.1} parent=55 // pred_fallthru
          _
        // Predicated region
        $region61: #{tpu_custom_call.1} parent=55 // pred_check
          %p325 = pneg %p139
        $region62: #{tpu_custom_call.1} parent=55 // pred_check_branch
          %327 = sbr.rel (%p325) target = $region64
        $region63: #{tpu_custom_call.1} parent=55 // pred_region
          %p328 = scmp.lt.s32.totalorder %s27, 1
          %s329 = scalar_select %p328, %s27, 1
          %s330 = smul.addr %s329, 4
          %s331 = scalar_lea.vmem %s3, %s330
        $region64: #{tpu_custom_call.1} parent=55 // pred_fallthru
          _
      $region56: #{tpu_custom_call.1} parent=5 // pred_fallthru
        _
    $region6: #{tpu_custom_call.1} parent=1 // loop_footer
      %s20 = sadd.s32 1, %s16
    $region7: #{tpu_custom_call.1} parent=1 // loop_footer_branch
      %15 = sbr.rel target = $region3
    $region8: #{tpu_custom_call.1} parent=1 // loop_exit
      _
    %332 = vsyncpa [#allocation5], 1
    %s333 = scalar_lea.sflag [#allocation5], 1
    %334 = vsyncpa %s333, 1
    %335 = vsyncpa [#allocation7], 1
    %s336 = scalar_lea.sflag [#allocation7], 1
    %337 = vsyncpa %s336, 1

</llo_original>
